<compile_context>
chip_gen: v6e
topology: v6e:2x2x1
jax: 0.10.0
libtpu: 0.0.40
codegen_flags: <defaults>
</compile_context>

<pallas_src>
import functools

import jax
import jax.numpy as jnp
from jax import lax
from jax.experimental import pallas as pl
from jax.experimental.pallas import tpu as pltpu


def _round_up(x: int, m: int) -> int:
    return ((x + m - 1) // m) * m


def _linear_kernel(x_ref, w_ref, b_ref, o_ref, acc_ref):
    """One (tm, tn) output tile, accumulated over the K (patch) grid axis.

    x_ref: (tm, tk)   activation tile
    w_ref: (tn, tk)   weight tile in PyTorch (E, P) orientation
    b_ref: (1,  tn)   bias tile
    o_ref: (tm, tn)   output tile
    acc_ref: (tm, tn) f32 VMEM accumulator scratch
    """
    k = pl.program_id(2)

    @pl.when(k == 0)
    def _init():
        acc_ref[...] = jnp.zeros_like(acc_ref)

    # Contract last dims of x (tm, tk) and w (tn, tk) -> (tm, tn). MXU consumes
    # this orientation directly, so no transpose of the weight is ever needed.
    acc_ref[...] += lax.dot_general(
        x_ref[...],
        w_ref[...],
        dimension_numbers=(((1,), (1,)), ((), ())),
        preferred_element_type=jnp.float32,
    )

    @pl.when(k == pl.num_programs(2) - 1)
    def _finalize():
        # Bias add happens exactly once per output tile, on the finalize step.
        o_ref[...] = (acc_ref[...] + b_ref[...].astype(jnp.float32)).astype(o_ref.dtype)


@functools.partial(jax.jit, static_argnames=("tm", "tn", "tk"))
def sp_resized_linear(x_nchw, weight, bias, *, tm=128, tn=256, tk=512):
    """SPResizedLinear forward.

    x_nchw: (N, C, H, W) float32
    weight: (E, P) float32   (PyTorch nn.Linear layout, P = C*H*W)
    bias:   (E,)   float32
    returns (N, E) float32
    """
    n, c, h, w = x_nchw.shape
    p = c * h * w
    e, p_w = weight.shape
    assert p_w == p, "patch_size must equal C*H*W"

    # Same row-major flatten as torch .reshape(n, c*h*w).
    x_flat = x_nchw.reshape(n, p)

    # --- tile sizes, clamped to (sublane=8, lane=128)-rounded problem dims ---
    tm = min(tm, _round_up(n, 8))
    tn = min(tn, _round_up(e, 128))
    tk = min(tk, _round_up(p, 128))

    n_pad = _round_up(n, tm)
    e_pad = _round_up(e, tn)
    p_pad = _round_up(p, tk)

    # Zero-padding the contraction dim adds exact zeros to the sum; the N/E
    # pads are sliced off before returning.
    x_p = jnp.pad(x_flat, ((0, n_pad - n), (0, p_pad - p)))
    w_p = jnp.pad(weight, ((0, e_pad - e), (0, p_pad - p)))
    b_p = jnp.pad(bias, (0, e_pad - e)).reshape(1, e_pad)

    grid = (n_pad // tm, e_pad // tn, p_pad // tk)

    # VMEM budget: double-buffered input tiles + output tile + f32 accumulator,
    # with slack. Kept well under v7x's 64 MiB physical VMEM.
    bytes_per = jnp.dtype(x_flat.dtype).itemsize
    step_bytes = (
        2 * (tm * tk + tn * tk + tn) * bytes_per  # double-buffered inputs + bias
        + 2 * tm * tn * bytes_per                 # double-buffered output
        + tm * tn * 4                             # f32 accumulator scratch
    )
    vmem_limit = int(min(max(4 * step_bytes, 8 << 20), 60 << 20))

    cost = pl.CostEstimate(
        flops=2 * n_pad * p_pad * e_pad,
        transcendentals=0,
        bytes_accessed=bytes_per * (n_pad * p_pad + e_pad * p_pad + n_pad * e_pad),
    )

    out_padded = pl.pallas_call(
        _linear_kernel,
        out_shape=jax.ShapeDtypeStruct((n_pad, e_pad), x_flat.dtype),
        grid_spec=pltpu.PrefetchScalarGridSpec(
            num_scalar_prefetch=0,
            grid=grid,
            in_specs=[
                pl.BlockSpec((tm, tk), lambda i, j, k: (i, k)),   # x tile
                pl.BlockSpec((tn, tk), lambda i, j, k: (j, k)),   # weight tile (E, P)
                pl.BlockSpec((1, tn), lambda i, j, k: (0, j)),    # bias tile
            ],
            out_specs=pl.BlockSpec((tm, tn), lambda i, j, k: (i, j)),
            scratch_shapes=[pltpu.VMEM((tm, tn), jnp.float32)],
        ),
        compiler_params=pltpu.CompilerParams(
            dimension_semantics=("parallel", "parallel", "arbitrary"),
            vmem_limit_bytes=vmem_limit,
        ),
        cost_estimate=cost,
    )(x_p, w_p, b_p)

    return out_padded[:n, :e]


if __name__ == "__main__":
    # Small shapes consistent with SPGAT(superpixel_aggregator='linear'):
    # patch_size = C*H*W, embed_size = hidden_dim.
    N, C, H, W = 2, 4, 16, 16
    PATCH = C * H * W      # 1024
    EMBED = 32             # hidden_dim

    key = jax.random.PRNGKey(0)
    kx, kw, kb = jax.random.split(key, 3)

    x = jax.random.normal(kx, (N, C, H, W), dtype=jnp.float32)

    # nn.Linear(patch_size, embed_size): weight (EMBED, PATCH), bias (EMBED,),
    # uniform(-1/sqrt(PATCH), 1/sqrt(PATCH)).
    bound = 1.0 / jnp.sqrt(jnp.float32(PATCH))
    weight = jax.random.uniform(kw, (EMBED, PATCH), jnp.float32, -bound, bound)
    bias = jax.random.uniform(kb, (EMBED,), jnp.float32, -bound, bound)

    out = sp_resized_linear(x, weight, bias)
    out = jax.block_until_ready(out)

    # Reference check in plain JAX.
    ref = x.reshape(N, PATCH) @ weight.T + bias
    assert out.shape == (N, EMBED)
    assert jnp.allclose(out, ref, atol=1e-4, rtol=1e-4), "mismatch vs reference"

    print("KERNEL_OK")
</pallas_src>

<mosaic_0001>
module attributes {stable_mosaic.version = 11 : i64} {
  func.func @_linear_kernel(%arg0: i32, %arg1: i32, %arg2: i32, %arg3: memref<8x512xf32, #tpu.memory_space<vmem>>, %arg4: memref<128x512xf32, #tpu.memory_space<vmem>>, %arg5: memref<1x128xf32, #tpu.memory_space<vmem>>, %arg6: memref<8x128xf32, #tpu.memory_space<vmem>>, %arg7: memref<8x128xf32, #tpu.memory_space<vmem>>) attributes {dimension_semantics = [#tpu.dimension_semantics<parallel>, #tpu.dimension_semantics<parallel>, #tpu.dimension_semantics<arbitrary>], iteration_bounds = array<i64: 1, 1, 2>, scalar_prefetch = 0 : i64, scratch_operands = 1 : i64, tpu.core_type = #tpu.core_type<tc>, window_params = [{transform_indices = @transform_0, window_bounds = array<i64: 8, 512>}, {transform_indices = @transform_1, window_bounds = array<i64: 128, 512>}, {transform_indices = @transform_2, window_bounds = array<i64: 1, 128>}, {transform_indices = @transform_3, window_bounds = array<i64: 8, 128>}]} {
    %c0_i32 = arith.constant 0 : i32
    %0 = arith.cmpi eq, %arg2, %c0_i32 : i32
    %1 = arith.extui %0 : i1 to i32
    %c0_i32_0 = arith.constant 0 : i32
    %2 = arith.cmpi ne, %1, %c0_i32_0 : i32
    scf.if %2 {
      %cst_9 = arith.constant 0.000000e+00 : f32
      %12 = vector.broadcast %cst_9 : f32 to vector<8x128xf32>
      %c0_10 = arith.constant 0 : index
      %c0_11 = arith.constant 0 : index
      %13 = vector.load %arg7[%c0_10, %c0_11] : memref<8x128xf32, #tpu.memory_space<vmem>>, vector<8x128xf32>
      tpu.vector_store %arg7[%c0_10, %c0_11], %12 {strides = array<i32>} : memref<8x128xf32, #tpu.memory_space<vmem>>, vector<8x128xf32>,
    } else {
    }
    %c0 = arith.constant 0 : index
    %c0_1 = arith.constant 0 : index
    %3 = vector.load %arg7[%c0, %c0_1] : memref<8x128xf32, #tpu.memory_space<vmem>>, vector<8x128xf32>
    %c0_2 = arith.constant 0 : index
    %c0_3 = arith.constant 0 : index
    %4 = vector.load %arg3[%c0_2, %c0_3] : memref<8x512xf32, #tpu.memory_space<vmem>>, vector<8x512xf32>
    %c0_4 = arith.constant 0 : index
    %c0_5 = arith.constant 0 : index
    %5 = vector.load %arg4[%c0_4, %c0_5] : memref<128x512xf32, #tpu.memory_space<vmem>>, vector<128x512xf32>
    %cst = arith.constant dense<0.000000e+00> : vector<8x128xf32>
    %6 = tpu.matmul %4, %5, %cst {dimension_numbers = #tpu.dot_dimension_numbers<[1], [1], [0], [0], [0, 0, 1, 0], [], []>} : vector<8x512xf32>, vector<128x512xf32>, vector<8x128xf32> -> vector<8x128xf32>
    %7 = arith.addf %3, %6 : vector<8x128xf32>
    %c0_6 = arith.constant 0 : index
    %c0_7 = arith.constant 0 : index
    %8 = vector.load %arg7[%c0_6, %c0_7] : memref<8x128xf32, #tpu.memory_space<vmem>>, vector<8x128xf32>
    tpu.vector_store %arg7[%c0_6, %c0_7], %7 {strides = array<i32>} : memref<8x128xf32, #tpu.memory_space<vmem>>, vector<8x128xf32>,
    %c1_i32 = arith.constant 1 : i32
    %9 = arith.cmpi eq, %arg2, %c1_i32 : i32
    %10 = arith.extui %9 : i1 to i32
    %c0_i32_8 = arith.constant 0 : i32
    %11 = arith.cmpi ne, %10, %c0_i32_8 : i32
    scf.if %11 {
      %c0_9 = arith.constant 0 : index
      %c0_10 = arith.constant 0 : index
      %12 = vector.load %arg7[%c0_9, %c0_10] : memref<8x128xf32, #tpu.memory_space<vmem>>, vector<8x128xf32>
      %c0_11 = arith.constant 0 : index
      %c0_12 = arith.constant 0 : index
      %13 = vector.load %arg5[%c0_11, %c0_12] : memref<1x128xf32, #tpu.memory_space<vmem>>, vector<1x128xf32>
      %14 = vector.broadcast %13 : vector<1x128xf32> to vector<8x128xf32>
      %15 = arith.addf %12, %14 : vector<8x128xf32>
      %c0_13 = arith.constant 0 : index
      %c0_14 = arith.constant 0 : index
      %16 = vector.load %arg6[%c0_13, %c0_14] : memref<8x128xf32, #tpu.memory_space<vmem>>, vector<8x128xf32>
      tpu.vector_store %arg6[%c0_13, %c0_14], %15 {strides = array<i32>} : memref<8x128xf32, #tpu.memory_space<vmem>>, vector<8x128xf32>,
    } else {
    }
    return
  }
  func.func @transform_0(%arg0: i32, %arg1: i32, %arg2: i32) -> (i32, i32) {
    %c0_i32 = arith.constant 0 : i32
    return %arg0, %arg2 : i32, i32
  }
  func.func @transform_1(%arg0: i32, %arg1: i32, %arg2: i32) -> (i32, i32) {
    %c0_i32 = arith.constant 0 : i32
    return %arg1, %arg2 : i32, i32
  }
  func.func @transform_2(%arg0: i32, %arg1: i32, %arg2: i32) -> (i32, i32) {
    %c0_i32 = arith.constant 0 : i32
    %c0_i32_0 = arith.constant 0 : i32
    return %c0_i32, %arg1 : i32, i32
  }
  func.func @transform_3(%arg0: i32, %arg1: i32, %arg2: i32) -> (i32, i32) {
    %c0_i32 = arith.constant 0 : i32
    return %arg0, %arg1 : i32, i32
  }
}

</mosaic_0001>

<llo_original>
// kernel: sp_resized_linear.1
$region0: #{sp_resized_linear.1}
  #allocation0 [shape = 'u32[]', space=smem, size = 0x4, offset = 0x4, fixed_abs, tag = 'smem constant byte address 0x4 - core index']
  #allocation1 [shape = 'u32[144,128]{1,0:T(1,128)}', space=vmem, size = 0x12000, scoped, tag = 'internal scratch']
  #allocation2 [shape = 'f32[8,128]{1,0:T(8,128)}', space=vmem, size = 0x1000, scoped, tag = 'scratch operand']
  %s0 = inlined_call_operand.vmem [shape: f32[8,1024], index: 0, kind: input, shape index: {}]
  %s1 = inlined_call_operand.vmem [shape: f32[128,1024], index: 1, kind: input, shape index: {}]
  %s2 = inlined_call_operand.vmem [shape: f32[1,128], index: 2, kind: input, shape index: {}]
  %s3 = inlined_call_operand.vmem [shape: f32[8,128], index: 3, kind: output, shape index: {}]
  %s4 = sld [smem:[#allocation0]]
  $region76: #{sp_resized_linear.1} parent=0
    _
  %s6 = ssub.s32 1, %s4
  %s7 = scalar_select 0, %s6, %s4
  $region1: #{sp_resized_linear.1} parent=0
    #allocation3 [shape = 'u8[524288]{0}', space=vmem, size = 0x80000, scoped, tag = 'input window, operand 1']
    loop: start=0, step=1, limit=4
    $region2: #{sp_resized_linear.1} parent=1 // loop_pre_header
      _
    $region3: #{sp_resized_linear.1} parent=1 // loop_header
      %s9 = sphi 0, %s13
      %p10 = scmp.ge.s32.totalorder %s9, 4
      %s16 = sphi 0, %s35
      %s17 = sphi 0, %s31
      %s18 = sphi 0, %s27
      %s19 = sphi 0, %s16
      %s20 = sphi 0, %s17
      %s21 = sphi 0, %s18
      %s22 = sphi 0, %s19
      %s23 = sphi 0, %s20
      %s24 = sphi 0, %s21
      %s40 = sphi 0, %s42
      %s43 = sphi 0, %s40
      %s44 = sphi 0, %s43
      %s60 = sphi 0, %s44
      %s68 = sphi 0, %s70
      %s71 = sphi 0, %s68
      %s72 = sphi 0, %s71
      %s88 = sphi 0, %s72
      %s94 = sphi 0, %s96
      %s97 = sphi 0, %s94
      %s98 = sphi 0, %s97
      %s114 = sphi 0, %s98
      %s122 = sphi 0, %s124
      %s125 = sphi 0, %s122
      %s126 = sphi 0, %s125
      %s142 = sphi 0, %s126
    $region4: #{sp_resized_linear.1} parent=1 // loop_header_branch
      %12 = sbr.rel (%p10) target = $region8
    $region5: #{sp_resized_linear.1} parent=1 // loop_body
      %s14 = ssub.s32 %s9, 1
      %s15 = ssub.s32 %s9, 2
      %s25 = sadd.s32 1, %s18
      %p26 = scmp.ge.s32.totalorder %s25, 2
      %s27 = scalar_select %p26, 0, %s25
      %s28 = sadd.s32 1, %s17
      %s29 = scalar_select %p26, %s28, %s17
      %p30 = scmp.ge.s32.totalorder %s29, 1
      %s31 = scalar_select %p30, 0, %s29
      %s32 = sadd.s32 1, %s16
      %s33 = scalar_select %p30, %s32, %s16
      %p34 = scmp.ge.s32.totalorder %s33, 1
      %s35 = scalar_select %p34, 0, %s33
      %s36 = ssub.s32 %s16, %s35
      %s37 = ssub.s32 %s18, %s27
      %s38 = sor.u32 %s36, %s37
      %p39 = scmp.eq.s32.totalorder %s38, 0
      %s41 = sadd.s32 %s40, 1
      %s42 = scalar_select %p39, %s40, %s41
      %p45 = pneg %p39
      %p46 = scmp.eq.s32.totalorder %s9, 1
      %p47 = por %p45, %p46
      %p48 = scmp.ne.s32.totalorder %s40, %s43
      %p49 = scmp.eq.s32.totalorder %s9, 0
      %p50 = por %p48, %p49
      %p51 = scmp.ne.s32.totalorder %s40, %s43
      %p52 = scmp.eq.s32.totalorder %s14, 1
      %p53 = por %p51, %p52
      %p54 = scmp.ne.s32.totalorder %s43, %s44
      %p55 = scmp.eq.s32.totalorder %s14, 0
      %p56 = por %p54, %p55
      %p57 = scmp.ne.s32.totalorder %s43, %s44
      %p58 = scmp.eq.s32.totalorder %s15, 1
      %p59 = por %p57, %p58
      %p61 = scmp.ne.s32.totalorder %s44, %s60
      %p62 = scmp.eq.s32.totalorder %s15, 0
      %p63 = por %p61, %p62
      %s64 = ssub.s32 %s17, %s31
      %s65 = ssub.s32 %s18, %s27
      %s66 = sor.u32 %s64, %s65
      %p67 = scmp.eq.s32.totalorder %s66, 0
      %s69 = sadd.s32 %s68, 1
      %s70 = scalar_select %p67, %s68, %s69
      %p73 = pneg %p67
      %p74 = scmp.eq.s32.totalorder %s9, 1
      %p75 = por %p73, %p74
      %p76 = scmp.ne.s32.totalorder %s68, %s71
      %p77 = scmp.eq.s32.totalorder %s9, 0
      %p78 = por %p76, %p77
      %p79 = scmp.ne.s32.totalorder %s68, %s71
      %p80 = scmp.eq.s32.totalorder %s14, 1
      %p81 = por %p79, %p80
      %p82 = scmp.ne.s32.totalorder %s71, %s72
      %p83 = scmp.eq.s32.totalorder %s14, 0
      %p84 = por %p82, %p83
      %p85 = scmp.ne.s32.totalorder %s71, %s72
      %p86 = scmp.eq.s32.totalorder %s15, 1
      %p87 = por %p85, %p86
      %p89 = scmp.ne.s32.totalorder %s72, %s88
      %p90 = scmp.eq.s32.totalorder %s15, 0
      %p91 = por %p89, %p90
      %s92 = ssub.s32 %s17, %s31
      %p93 = scmp.eq.s32.totalorder %s92, 0
      %s95 = sadd.s32 %s94, 1
      %s96 = scalar_select %p93, %s94, %s95
      %p99 = pneg %p93
      %p100 = scmp.eq.s32.totalorder %s9, 1
      %p101 = por %p99, %p100
      %p102 = scmp.ne.s32.totalorder %s94, %s97
      %p103 = scmp.eq.s32.totalorder %s9, 0
      %p104 = por %p102, %p103
      %p105 = scmp.ne.s32.totalorder %s94, %s97
      %p106 = scmp.eq.s32.totalorder %s14, 1
      %p107 = por %p105, %p106
      %p108 = scmp.ne.s32.totalorder %s97, %s98
      %p109 = scmp.eq.s32.totalorder %s14, 0
      %p110 = por %p108, %p109
      %p111 = scmp.ne.s32.totalorder %s97, %s98
      %p112 = scmp.eq.s32.totalorder %s15, 1
      %p113 = por %p111, %p112
      %p115 = scmp.ne.s32.totalorder %s98, %s114
      %p116 = scmp.eq.s32.totalorder %s15, 0
      %p117 = por %p115, %p116
      %s118 = ssub.s32 %s16, %s35
      %s119 = ssub.s32 %s17, %s31
      %s120 = sor.u32 %s118, %s119
      %p121 = scmp.eq.s32.totalorder %s120, 0
      %s123 = sadd.s32 %s122, 1
      %s124 = scalar_select %p121, %s122, %s123
      %p127 = pneg %p121
      %p128 = scmp.eq.s32.totalorder %s9, 1
      %p129 = por %p127, %p128
      %p130 = scmp.ne.s32.totalorder %s122, %s125
      %p131 = scmp.eq.s32.totalorder %s9, 0
      %p132 = por %p130, %p131
      %p133 = scmp.ne.s32.totalorder %s122, %s125
      %p134 = scmp.eq.s32.totalorder %s14, 1
      %p135 = por %p133, %p134
      %p136 = scmp.ne.s32.totalorder %s125, %s126
      %p137 = scmp.eq.s32.totalorder %s14, 0
      %p138 = por %p136, %p137
      %p139 = scmp.ne.s32.totalorder %s125, %s126
      %p140 = scmp.eq.s32.totalorder %s15, 1
      %p141 = por %p139, %p140
      %p143 = scmp.ne.s32.totalorder %s126, %s142
      %p144 = scmp.eq.s32.totalorder %s15, 0
      %p145 = por %p143, %p144
      %p146 = scmp.le.s32.totalorder 1, %s9
      %p147 = scmp.lt.s32.totalorder %s9, 3
      %p148 = pnand %p146, %p147
      %p149 = pneg %p148
      // Predicated region
      $region9: #{sp_resized_linear.1} parent=5 // pred_check
        _
      $region10: #{sp_resized_linear.1} parent=5 // pred_check_branch
        %151 = sbr.rel (%p148) target = $region12
      $region11: #{sp_resized_linear.1} parent=5 // pred_region
        %s152 = ssub.s32 %s9, 1
        // Predicated region
        $region13: #{sp_resized_linear.1} parent=11 // pred_check
          %p153 = pneg %p110
        $region14: #{sp_resized_linear.1} parent=11 // pred_check_branch
          %155 = sbr.rel (%p153) target = $region16
        $region15: #{sp_resized_linear.1} parent=11 // pred_region
          %p156 = scmp.lt.s32.totalorder %s20, 0
          %s157 = scalar_select %p156, %s20, 0
          %s158 = scalar_lea.vmem %s2, %s157
        $region16: #{sp_resized_linear.1} parent=11 // pred_fallthru
          _
      $region12: #{sp_resized_linear.1} parent=5 // pred_fallthru
        _
      %p159 = scmp.lt.s32.totalorder %s9, 2
      // Predicated region
      $region17: #{sp_resized_linear.1} parent=5 // pred_check
        %p160 = pneg %p159
      $region18: #{sp_resized_linear.1} parent=5 // pred_check_branch
        %162 = sbr.rel (%p160) target = $region20
      $region19: #{sp_resized_linear.1} parent=5 // pred_region
        // Predicated region
        $region21: #{sp_resized_linear.1} parent=19 // pred_check
          %p163 = pneg %p50
        $region22: #{sp_resized_linear.1} parent=19 // pred_check_branch
          %165 = sbr.rel (%p163) target = $region24
        $region23: #{sp_resized_linear.1} parent=19 // pred_region
          %s166 = smul.u32 4, %s18
          %p167 = scmp.lt.s32.totalorder %s16, 0
          %s168 = scalar_select %p167, %s16, 0
          %p169 = scmp.lt.s32.totalorder %s166, 7
          %s170 = scalar_select %p169, %s166, 7
          %s171 = smul.addr %s168, 8
          %s172 = sadd.s32 %s170, %s171
          %s173 = smul.addr %s172, 8
          %s174 = scalar_lea.vmem %s0, %s173
          %s175 = smul.u32 4, %s18
        $region24: #{sp_resized_linear.1} parent=19 // pred_fallthru
          _
        // Predicated region
        $region25: #{sp_resized_linear.1} parent=19 // pred_check
          %p176 = pneg %p78
        $region26: #{sp_resized_linear.1} parent=19 // pred_check_branch
          %178 = sbr.rel (%p176) target = $region28
        $region27: #{sp_resized_linear.1} parent=19 // pred_region
          %s179 = sand.u32 %s68, 1
          %s180 = sand.u32 %s68, 1
          %s181 = smul.addr %s180, 512
          %s182 = scalar_lea.vmem [#allocation3], %s181
          %s183 = smul.u32 16, %s17
          %s184 = smul.u32 4, %s18
          %s185 = smul.addr %s183, 8
          %s186 = sadd.s32 %s184, %s185
          %s187 = smul.addr %s186, 8
          %s188 = scalar_lea.vmem %s1, %s187
          // Predicated region
          $region29: #{sp_resized_linear.1} parent=27 // pred_check
            _
          $region30: #{sp_resized_linear.1} parent=27 // pred_check_branch
            %190 = sbr.rel (0) target = $region32
          $region31: #{sp_resized_linear.1} parent=27 // pred_region
            // Predicated region
            $region33: #{sp_resized_linear.1} parent=31 // pred_check
              _
            $region34: #{sp_resized_linear.1} parent=31 // pred_check_branch
              %192 = sbr.rel (0) target = $region36
            $region35: #{sp_resized_linear.1} parent=31 // pred_region
              loop: start=0, step=1, limit=1
              $region37: #{sp_resized_linear.1} parent=35 // loop_pre_header
                _
              $region38: #{sp_resized_linear.1} parent=35 // loop_header
                %s194 = sphi 0, %s198
                %p195 = scmp.ge.s32.totalorder %s194, 1
                %s199 = sphi %s188, %s188
                %s200 = sphi %s182, %s182
              $region39: #{sp_resized_linear.1} parent=35 // loop_header_branch
                %197 = sbr.rel (%p195) target = $region43
              $region40: #{sp_resized_linear.1} parent=35 // loop_body
                %v201 = vld [vmem:[%s199] sm:$0xff]
                %202 = vst [vmem:[%s200] sm:$0xff] %v201
                %v203 = vld [vmem:[%s199 + $0x8] sm:$0xff]
                %204 = vst [vmem:[%s200 + $0x8] sm:$0xff] %v203
                %v205 = vld [vmem:[%s199 + $0x10] sm:$0xff]
                %206 = vst [vmem:[%s200 + $0x10] sm:$0xff] %v205
                %v207 = vld [vmem:[%s199 + $0x18] sm:$0xff]
                %208 = vst [vmem:[%s200 + $0x18] sm:$0xff] %v207
                %v209 = vld [vmem:[%s199 + $0x40] sm:$0xff]
                %210 = vst [vmem:[%s200 + $0x20] sm:$0xff] %v209
                %v211 = vld [vmem:[%s199 + $0x48] sm:$0xff]
                %212 = vst [vmem:[%s200 + $0x28] sm:$0xff] %v211
                %v213 = vld [vmem:[%s199 + $0x50] sm:$0xff]
                %214 = vst [vmem:[%s200 + $0x30] sm:$0xff] %v213
                %v215 = vld [vmem:[%s199 + $0x58] sm:$0xff]
                %216 = vst [vmem:[%s200 + $0x38] sm:$0xff] %v215
                %v217 = vld [vmem:[%s199 + $0x80] sm:$0xff]
                %218 = vst [vmem:[%s200 + $0x40] sm:$0xff] %v217
                %v219 = vld [vmem:[%s199 + $0x88] sm:$0xff]
                %220 = vst [vmem:[%s200 + $0x48] sm:$0xff] %v219
                %v221 = vld [vmem:[%s199 + $0x90] sm:$0xff]
                %222 = vst [vmem:[%s200 + $0x50] sm:$0xff] %v221
                %v223 = vld [vmem:[%s199 + $0x98] sm:$0xff]
                %224 = vst [vmem:[%s200 + $0x58] sm:$0xff] %v223
                %v225 = vld [vmem:[%s199 + $0xc0] sm:$0xff]
                %226 = vst [vmem:[%s200 + $0x60] sm:$0xff] %v225
                %v227 = vld [vmem:[%s199 + $0xc8] sm:$0xff]
                %228 = vst [vmem:[%s200 + $0x68] sm:$0xff] %v227
                %v229 = vld [vmem:[%s199 + $0xd0] sm:$0xff]
                %230 = vst [vmem:[%s200 + $0x70] sm:$0xff] %v229
                %v231 = vld [vmem:[%s199 + $0xd8] sm:$0xff]
                %232 = vst [vmem:[%s200 + $0x78] sm:$0xff] %v231
                %v233 = vld [vmem:[%s199 + $0x100] sm:$0xff]
                %234 = vst [vmem:[%s200 + $0x80] sm:$0xff] %v233
                %v235 = vld [vmem:[%s199 + $0x108] sm:$0xff]
                %236 = vst [vmem:[%s200 + $0x88] sm:$0xff] %v235
                %v237 = vld [vmem:[%s199 + $0x110] sm:$0xff]
                %238 = vst [vmem:[%s200 + $0x90] sm:$0xff] %v237
                %v239 = vld [vmem:[%s199 + $0x118] sm:$0xff]
                %240 = vst [vmem:[%s200 + $0x98] sm:$0xff] %v239
                %v241 = vld [vmem:[%s199 + $0x140] sm:$0xff]
                %242 = vst [vmem:[%s200 + $0xa0] sm:$0xff] %v241
                %v243 = vld [vmem:[%s199 + $0x148] sm:$0xff]
                %244 = vst [vmem:[%s200 + $0xa8] sm:$0xff] %v243
                %v245 = vld [vmem:[%s199 + $0x150] sm:$0xff]
                %246 = vst [vmem:[%s200 + $0xb0] sm:$0xff] %v245
                %v247 = vld [vmem:[%s199 + $0x158] sm:$0xff]
                %248 = vst [vmem:[%s200 + $0xb8] sm:$0xff] %v247
                %v249 = vld [vmem:[%s199 + $0x180] sm:$0xff]
                %250 = vst [vmem:[%s200 + $0xc0] sm:$0xff] %v249
                %v251 = vld [vmem:[%s199 + $0x188] sm:$0xff]
                %252 = vst [vmem:[%s200 + $0xc8] sm:$0xff] %v251
                %v253 = vld [vmem:[%s199 + $0x190] sm:$0xff]
                %254 = vst [vmem:[%s200 + $0xd0] sm:$0xff] %v253
                %v255 = vld [vmem:[%s199 + $0x198] sm:$0xff]
                %256 = vst [vmem:[%s200 + $0xd8] sm:$0xff] %v255
                %v257 = vld [vmem:[%s199 + $0x1c0] sm:$0xff]
                %258 = vst [vmem:[%s200 + $0xe0] sm:$0xff] %v257
                %v259 = vld [vmem:[%s199 + $0x1c8] sm:$0xff]
                %260 = vst [vmem:[%s200 + $0xe8] sm:$0xff] %v259
                %v261 = vld [vmem:[%s199 + $0x1d0] sm:$0xff]
                %262 = vst [vmem:[%s200 + $0xf0] sm:$0xff] %v261
                %v263 = vld [vmem:[%s199 + $0x1d8] sm:$0xff]
                %264 = vst [vmem:[%s200 + $0xf8] sm:$0xff] %v263
                %v265 = vld [vmem:[%s199 + $0x200] sm:$0xff]
                %266 = vst [vmem:[%s200 + $0x100] sm:$0xff] %v265
                %v267 = vld [vmem:[%s199 + $0x208] sm:$0xff]
                %268 = vst [vmem:[%s200 + $0x108] sm:$0xff] %v267
                %v269 = vld [vmem:[%s199 + $0x210] sm:$0xff]
                %270 = vst [vmem:[%s200 + $0x110] sm:$0xff] %v269
                %v271 = vld [vmem:[%s199 + $0x218] sm:$0xff]
                %272 = vst [vmem:[%s200 + $0x118] sm:$0xff] %v271
                %v273 = vld [vmem:[%s199 + $0x240] sm:$0xff]
                %274 = vst [vmem:[%s200 + $0x120] sm:$0xff] %v273
                %v275 = vld [vmem:[%s199 + $0x248] sm:$0xff]
                %276 = vst [vmem:[%s200 + $0x128] sm:$0xff] %v275
                %v277 = vld [vmem:[%s199 + $0x250] sm:$0xff]
                %278 = vst [vmem:[%s200 + $0x130] sm:$0xff] %v277
                %v279 = vld [vmem:[%s199 + $0x258] sm:$0xff]
                %280 = vst [vmem:[%s200 + $0x138] sm:$0xff] %v279
                %v281 = vld [vmem:[%s199 + $0x280] sm:$0xff]
                %282 = vst [vmem:[%s200 + $0x140] sm:$0xff] %v281
                %v283 = vld [vmem:[%s199 + $0x288] sm:$0xff]
                %284 = vst [vmem:[%s200 + $0x148] sm:$0xff] %v283
                %v285 = vld [vmem:[%s199 + $0x290] sm:$0xff]
                %286 = vst [vmem:[%s200 + $0x150] sm:$0xff] %v285
                %v287 = vld [vmem:[%s199 + $0x298] sm:$0xff]
                %288 = vst [vmem:[%s200 + $0x158] sm:$0xff] %v287
                %v289 = vld [vmem:[%s199 + $0x2c0] sm:$0xff]
                %290 = vst [vmem:[%s200 + $0x160] sm:$0xff] %v289
                %v291 = vld [vmem:[%s199 + $0x2c8] sm:$0xff]
                %292 = vst [vmem:[%s200 + $0x168] sm:$0xff] %v291
                %v293 = vld [vmem:[%s199 + $0x2d0] sm:$0xff]
                %294 = vst [vmem:[%s200 + $0x170] sm:$0xff] %v293
                %v295 = vld [vmem:[%s199 + $0x2d8] sm:$0xff]
                %296 = vst [vmem:[%s200 + $0x178] sm:$0xff] %v295
                %v297 = vld [vmem:[%s199 + $0x300] sm:$0xff]
                %298 = vst [vmem:[%s200 + $0x180] sm:$0xff] %v297
                %v299 = vld [vmem:[%s199 + $0x308] sm:$0xff]
                %300 = vst [vmem:[%s200 + $0x188] sm:$0xff] %v299
                %v301 = vld [vmem:[%s199 + $0x310] sm:$0xff]
                %302 = vst [vmem:[%s200 + $0x190] sm:$0xff] %v301
                %v303 = vld [vmem:[%s199 + $0x318] sm:$0xff]
                %304 = vst [vmem:[%s200 + $0x198] sm:$0xff] %v303
                %v305 = vld [vmem:[%s199 + $0x340] sm:$0xff]
                %306 = vst [vmem:[%s200 + $0x1a0] sm:$0xff] %v305
                %v307 = vld [vmem:[%s199 + $0x348] sm:$0xff]
                %308 = vst [vmem:[%s200 + $0x1a8] sm:$0xff] %v307
                %v309 = vld [vmem:[%s199 + $0x350] sm:$0xff]
                %310 = vst [vmem:[%s200 + $0x1b0] sm:$0xff] %v309
                %v311 = vld [vmem:[%s199 + $0x358] sm:$0xff]
                %312 = vst [vmem:[%s200 + $0x1b8] sm:$0xff] %v311
                %v313 = vld [vmem:[%s199 + $0x380] sm:$0xff]
                %314 = vst [vmem:[%s200 + $0x1c0] sm:$0xff] %v313
                %v315 = vld [vmem:[%s199 + $0x388] sm:$0xff]
                %316 = vst [vmem:[%s200 + $0x1c8] sm:$0xff] %v315
                %v317 = vld [vmem:[%s199 + $0x390] sm:$0xff]
                %318 = vst [vmem:[%s200 + $0x1d0] sm:$0xff] %v317
                %v319 = vld [vmem:[%s199 + $0x398] sm:$0xff]
                %320 = vst [vmem:[%s200 + $0x1d8] sm:$0xff] %v319
                %v321 = vld [vmem:[%s199 + $0x3c0] sm:$0xff]
                %322 = vst [vmem:[%s200 + $0x1e0] sm:$0xff] %v321
                %v323 = vld [vmem:[%s199 + $0x3c8] sm:$0xff]
                %324 = vst [vmem:[%s200 + $0x1e8] sm:$0xff] %v323
                %v325 = vld [vmem:[%s199 + $0x3d0] sm:$0xff]
                %326 = vst [vmem:[%s200 + $0x1f0] sm:$0xff] %v325
                %v327 = vld [vmem:[%s199 + $0x3d8] sm:$0xff]
                %328 = vst [vmem:[%s200 + $0x1f8] sm:$0xff] %v327
              $region41: #{sp_resized_linear.1} parent=35 // loop_footer
                %s198 = sadd.s32 1, %s194
              $region42: #{sp_resized_linear.1} parent=35 // loop_footer_branch
                %193 = sbr.rel target = $region38
              $region43: #{sp_resized_linear.1} parent=35 // loop_exit
                _
            $region36: #{sp_resized_linear.1} parent=31 // pred_fallthru
              _
            // Predicated region
            $region44: #{sp_resized_linear.1} parent=31 // pred_check
              _
            $region45: #{sp_resized_linear.1} parent=31 // pred_check_branch
              %330 = sbr.rel target = $region47
            $region46: #{sp_resized_linear.1} parent=31 // pred_region
              _
            $region47: #{sp_resized_linear.1} parent=31 // pred_fallthru
              _
          $region32: #{sp_resized_linear.1} parent=27 // pred_fallthru
            _
          %331 = vnop
        $region28: #{sp_resized_linear.1} parent=19 // pred_fallthru
          _
      $region20: #{sp_resized_linear.1} parent=5 // pred_fallthru
        _
      %p332 = scmp.le.s32.totalorder 1, %s9
      %p333 = scmp.lt.s32.totalorder %s9, 3
      %p334 = pnand %p332, %p333
      %p335 = pneg %p334
      // Predicated region
      $region48: #{sp_resized_linear.1} parent=5 // pred_check
        _
      $region49: #{sp_resized_linear.1} parent=5 // pred_check_branch
        %337 = sbr.rel (%p334) target = $region51
      $region50: #{sp_resized_linear.1} parent=5 // pred_region
        %s338 = ssub.s32 %s9, 1
        %s339 = sand.u32 %s71, 1
        %s340 = sand.u32 %s71, 1
        %s341 = smul.addr %s340, 512
        %s342 = scalar_lea.vmem [#allocation3], %s341
        // Predicated region
        $region52: #{sp_resized_linear.1} parent=50 // pred_check
          %p343 = pneg %p84
        $region53: #{sp_resized_linear.1} parent=50 // pred_check_branch
          %345 = sbr.rel (%p343) target = $region55
        $region54: #{sp_resized_linear.1} parent=50 // pred_region
          _
        $region55: #{sp_resized_linear.1} parent=50 // pred_fallthru
          _
        %s346 = smul.u32 4, %s21
        %p347 = scmp.lt.s32.totalorder %s19, 0
        %s348 = scalar_select %p347, %s19, 0
        %p349 = scmp.lt.s32.totalorder %s346, 7
        %s350 = scalar_select %p349, %s346, 7
        %s351 = smul.addr %s348, 8
        %s352 = sadd.s32 %s350, %s351
        %s353 = smul.addr %s352, 8
        %s354 = scalar_lea.vmem %s0, %s353
        %p355 = pneg %p56
        %p356 = pneg %p53
        %s357 = sand.u32 %s71, 1
        %s358 = sand.u32 %s71, 1
        %s359 = smul.addr %s358, 512
        %s360 = scalar_lea.vmem [#allocation3], %s359
        %p361 = pneg %p84
        %p362 = pneg %p81
        %p363 = scmp.lt.s32.totalorder %s20, 0
        %s364 = scalar_select %p363, %s20, 0
        %s365 = scalar_lea.vmem %s2, %s364
        %p366 = pneg %p110
        %p367 = pneg %p107
        %p368 = pneg %p138
        %p369 = pneg %p135
        %p370 = scmp.lt.s32.totalorder %s19, 0
        %s371 = scalar_select %p370, %s19, 0
        %p372 = scmp.lt.s32.totalorder %s20, 0
        %s373 = scalar_select %p372, %s20, 0
        %s374 = sadd.s32 %s373, %s371
        %s375 = smul.addr %s374, 8
        %s376 = scalar_lea.vmem %s3, %s375
        %s377 = smul.u32 4, %s21
        %p378 = scmp.lt.s32.totalorder %s19, 0
        %s379 = scalar_select %p378, %s19, 0
        %p380 = scmp.lt.s32.totalorder %s377, 7
        %s381 = scalar_select %p380, %s377, 7
        %s382 = smul.addr %s379, 8
        %s383 = sadd.s32 %s381, %s382
        %s384 = smul.addr %s383, 8
        %s385 = scalar_lea.vmem %s0, %s384
        %s386 = smul.u32 4, %s21
        %s387 = smul.u32 16, %s20
        %s388 = smul.u32 4, %s21
        %p389 = scmp.lt.s32.totalorder %s20, 0
        %s390 = scalar_select %p389, %s20, 0
        %s391 = scalar_lea.vmem %s2, %s390
        %p392 = scmp.lt.s32.totalorder %s19, 0
        %s393 = scalar_select %p392, %s19, 0
        %p394 = scmp.lt.s32.totalorder %s20, 0
        %s395 = scalar_select %p394, %s20, 0
        %s396 = sadd.s32 %s395, %s393
        %s397 = smul.addr %s396, 8
        %s398 = scalar_lea.vmem %s3, %s397
        %p399 = scmp.eq.s32.totalorder %s21, 0
        // Predicated region
        $region56: #{sp_resized_linear.1} parent=50 // pred_check
          %p400 = pneg %p399
        $region57: #{sp_resized_linear.1} parent=50 // pred_check_branch
          %402 = sbr.rel (%p400) target = $region59
        $region58: #{sp_resized_linear.1} parent=50 // pred_region
          %403 = vst [vmem:[#allocation2] sm:$0xff] 0.0
        $region59: #{sp_resized_linear.1} parent=50 // pred_fallthru
          _
        %v404 = vld [vmem:[#allocation2] sm:$0xff]
        %v405 = vld [vmem:[%s385] sm:$0xff]
        %v406 = vld [vmem:[%s385 + $0x8] sm:$0xff]
        %v407 = vld [vmem:[%s385 + $0x10] sm:$0xff]
        %v408 = vld [vmem:[%s385 + $0x18] sm:$0xff]
        %v409 = vld [vmem:[%s342] sm:$0xff]
        %v410 = vld [vmem:[%s342 + $0x8] sm:$0xff]
        %v411 = vld [vmem:[%s342 + $0x10] sm:$0xff]
        %v412 = vld [vmem:[%s342 + $0x18] sm:$0xff]
        %v413 = vld [vmem:[%s342 + $0x20] sm:$0xff]
        %v414 = vld [vmem:[%s342 + $0x28] sm:$0xff]
        %v415 = vld [vmem:[%s342 + $0x30] sm:$0xff]
        %v416 = vld [vmem:[%s342 + $0x38] sm:$0xff]
        %v417 = vld [vmem:[%s342 + $0x40] sm:$0xff]
        %v418 = vld [vmem:[%s342 + $0x48] sm:$0xff]
        %v419 = vld [vmem:[%s342 + $0x50] sm:$0xff]
        %v420 = vld [vmem:[%s342 + $0x58] sm:$0xff]
        %v421 = vld [vmem:[%s342 + $0x60] sm:$0xff]
        %v422 = vld [vmem:[%s342 + $0x68] sm:$0xff]
        %v423 = vld [vmem:[%s342 + $0x70] sm:$0xff]
        %v424 = vld [vmem:[%s342 + $0x78] sm:$0xff]
        %v425 = vld [vmem:[%s342 + $0x80] sm:$0xff]
        %v426 = vld [vmem:[%s342 + $0x88] sm:$0xff]
        %v427 = vld [vmem:[%s342 + $0x90] sm:$0xff]
        %v428 = vld [vmem:[%s342 + $0x98] sm:$0xff]
        %v429 = vld [vmem:[%s342 + $0xa0] sm:$0xff]
        %v430 = vld [vmem:[%s342 + $0xa8] sm:$0xff]
        %v431 = vld [vmem:[%s342 + $0xb0] sm:$0xff]
        %v432 = vld [vmem:[%s342 + $0xb8] sm:$0xff]
        %v433 = vld [vmem:[%s342 + $0xc0] sm:$0xff]
        %v434 = vld [vmem:[%s342 + $0xc8] sm:$0xff]
        %v435 = vld [vmem:[%s342 + $0xd0] sm:$0xff]
        %v436 = vld [vmem:[%s342 + $0xd8] sm:$0xff]
        %v437 = vld [vmem:[%s342 + $0xe0] sm:$0xff]
        %v438 = vld [vmem:[%s342 + $0xe8] sm:$0xff]
        %v439 = vld [vmem:[%s342 + $0xf0] sm:$0xff]
        %v440 = vld [vmem:[%s342 + $0xf8] sm:$0xff]
        %v441 = vld [vmem:[%s342 + $0x100] sm:$0xff]
        %v442 = vld [vmem:[%s342 + $0x108] sm:$0xff]
        %v443 = vld [vmem:[%s342 + $0x110] sm:$0xff]
        %v444 = vld [vmem:[%s342 + $0x118] sm:$0xff]
        %v445 = vld [vmem:[%s342 + $0x120] sm:$0xff]
        %v446 = vld [vmem:[%s342 + $0x128] sm:$0xff]
        %v447 = vld [vmem:[%s342 + $0x130] sm:$0xff]
        %v448 = vld [vmem:[%s342 + $0x138] sm:$0xff]
        %v449 = vld [vmem:[%s342 + $0x140] sm:$0xff]
        %v450 = vld [vmem:[%s342 + $0x148] sm:$0xff]
        %v451 = vld [vmem:[%s342 + $0x150] sm:$0xff]
        %v452 = vld [vmem:[%s342 + $0x158] sm:$0xff]
        %v453 = vld [vmem:[%s342 + $0x160] sm:$0xff]
        %v454 = vld [vmem:[%s342 + $0x168] sm:$0xff]
        %v455 = vld [vmem:[%s342 + $0x170] sm:$0xff]
        %v456 = vld [vmem:[%s342 + $0x178] sm:$0xff]
        %v457 = vld [vmem:[%s342 + $0x180] sm:$0xff]
        %v458 = vld [vmem:[%s342 + $0x188] sm:$0xff]
        %v459 = vld [vmem:[%s342 + $0x190] sm:$0xff]
        %v460 = vld [vmem:[%s342 + $0x198] sm:$0xff]
        %v461 = vld [vmem:[%s342 + $0x1a0] sm:$0xff]
        %v462 = vld [vmem:[%s342 + $0x1a8] sm:$0xff]
        %v463 = vld [vmem:[%s342 + $0x1b0] sm:$0xff]
        %v464 = vld [vmem:[%s342 + $0x1b8] sm:$0xff]
        %v465 = vld [vmem:[%s342 + $0x1c0] sm:$0xff]
        %v466 = vld [vmem:[%s342 + $0x1c8] sm:$0xff]
        %v467 = vld [vmem:[%s342 + $0x1d0] sm:$0xff]
        %v468 = vld [vmem:[%s342 + $0x1d8] sm:$0xff]
        %v469 = vld [vmem:[%s342 + $0x1e0] sm:$0xff]
        %v470 = vld [vmem:[%s342 + $0x1e8] sm:$0xff]
        %v471 = vld [vmem:[%s342 + $0x1f0] sm:$0xff]
        %v472 = vld [vmem:[%s342 + $0x1f8] sm:$0xff]
        %473 = vmatprep.subr.mxu0 %v470
        %474 = vmatpush1.xpose.msra.mxu0 %v469
        %475 = vmatprep.subr.mxu0 %v466
        %476 = vmatpush1.xpose.msra.mxu0 %v465
        %477 = vmatprep.subr.mxu0 %v462
        %478 = vmatpush1.xpose.msra.mxu0 %v461
        %479 = vmatprep.subr.mxu0 %v458
        %480 = vmatpush1.xpose.msra.mxu0 %v457
        %481 = vmatprep.subr.mxu0 %v454
        %482 = vmatpush1.xpose.msra.mxu0 %v453
        %483 = vmatprep.subr.mxu0 %v450
        %484 = vmatpush1.xpose.msra.mxu0 %v449
        %485 = vmatprep.subr.mxu0 %v446
        %486 = vmatpush1.xpose.msra.mxu0 %v445
        %487 = vmatprep.subr.mxu0 %v442
        %488 = vmatpush1.xpose.msra.mxu0 %v441
        %489 = vmatprep.subr.mxu0 %v438
        %490 = vmatpush1.xpose.msra.mxu0 %v437
        %491 = vmatprep.subr.mxu0 %v434
        %492 = vmatpush1.xpose.msra.mxu0 %v433
        %493 = vmatprep.subr.mxu0 %v430
        %494 = vmatpush1.xpose.msra.mxu0 %v429
        %495 = vmatprep.subr.mxu0 %v426
        %496 = vmatpush1.xpose.msra.mxu0 %v425
        %497 = vmatprep.subr.mxu0 %v422
        %498 = vmatpush1.xpose.msra.mxu0 %v421
        %499 = vmatprep.subr.mxu0 %v418
        %500 = vmatpush1.xpose.msra.mxu0 %v417
        %501 = vmatprep.subr.mxu0 %v414
        %502 = vmatpush1.xpose.msra.mxu0 %v413
        %503 = vmatprep.subr.mxu0 %v410
        %504 = vmatpush1.xpose.msra.mxu0 %v409
        %505 = vmatprep.subr.mxu0 0.0
        %506 = vmatpush2.xpose.msra.mxu0 0.0
        %507 = vmatprep.subr.mxu0 0.0
        %508 = vmatpush2.xpose.msra.mxu0 0.0
        %509 = vmatprep.subr.mxu0 0.0
        %510 = vmatpush2.xpose.msra.mxu0 0.0
        %511 = vmatprep.subr.mxu0 0.0
        %512 = vmatpush2.xpose.msra.mxu0 0.0
        %513 = vmatprep.subr.mxu0 0.0
        %514 = vmatpush2.xpose.msra.mxu0 0.0
        %515 = vmatprep.subr.mxu0 0.0
        %516 = vmatpush2.xpose.msra.mxu0 0.0
        %517 = vmatprep.subr.mxu0 0.0
        %518 = vmatpush2.xpose.msra.mxu0 0.0
        %519 = vmatprep.subr.mxu0 0.0
        %520 = vmatpush2.xpose.msra.mxu0 0.0
        %521 = vmatprep.subr.mxu0 0.0
        %522 = vmatpush2.xpose.msra.mxu0 0.0
        %523 = vmatprep.subr.mxu0 0.0
        %524 = vmatpush2.xpose.msra.mxu0 0.0
        %525 = vmatprep.subr.mxu0 0.0
        %526 = vmatpush2.xpose.msra.mxu0 0.0
        %527 = vmatprep.subr.mxu0 0.0
        %528 = vmatpush2.xpose.msra.mxu0 0.0
        %529 = vmatprep.subr.mxu0 0.0
        %530 = vmatpush2.xpose.msra.mxu0 0.0
        %531 = vmatprep.subr.mxu0 0.0
        %532 = vmatpush2.xpose.msra.mxu0 0.0
        %533 = vmatprep.subr.mxu0 0.0
        %534 = vmatpush2.xpose.msra.mxu0 0.0
        %535 = vmatprep.subr.mxu0 0.0
        %536 = vmatpush2.xpose.msra.mxu0 0.0
        %537 = vmatprep.mubr.f32.mxu0 %v406
        %538 = vmatmul.mubr.f32.gmra.mxu0 %v405
        %v539 = vpop.f32.mrf.mxu0
        %v540 = vadd.f32 0.0, %v539
        %v541 = vpop.f32.mrf.mxu0
        %542 = vdwg.mxu0
        %543 = vmatprep.subr.mxu0 %v472
        %544 = vmatpush1.xpose.msra.mxu0 %v471
        %545 = vmatprep.subr.mxu0 %v468
        %546 = vmatpush1.xpose.msra.mxu0 %v467
        %547 = vmatprep.subr.mxu0 %v464
        %548 = vmatpush1.xpose.msra.mxu0 %v463
        %549 = vmatprep.subr.mxu0 %v460
        %550 = vmatpush1.xpose.msra.mxu0 %v459
        %551 = vmatprep.subr.mxu0 %v456
        %552 = vmatpush1.xpose.msra.mxu0 %v455
        %553 = vmatprep.subr.mxu0 %v452
        %554 = vmatpush1.xpose.msra.mxu0 %v451
        %555 = vmatprep.subr.mxu0 %v448
        %556 = vmatpush1.xpose.msra.mxu0 %v447
        %557 = vmatprep.subr.mxu0 %v444
        %558 = vmatpush1.xpose.msra.mxu0 %v443
        %559 = vmatprep.subr.mxu0 %v440
        %560 = vmatpush1.xpose.msra.mxu0 %v439
        %561 = vmatprep.subr.mxu0 %v436
        %562 = vmatpush1.xpose.msra.mxu0 %v435
        %563 = vmatprep.subr.mxu0 %v432
        %564 = vmatpush1.xpose.msra.mxu0 %v431
        %565 = vmatprep.subr.mxu0 %v428
        %566 = vmatpush1.xpose.msra.mxu0 %v427
        %567 = vmatprep.subr.mxu0 %v424
        %568 = vmatpush1.xpose.msra.mxu0 %v423
        %569 = vmatprep.subr.mxu0 %v420
        %570 = vmatpush1.xpose.msra.mxu0 %v419
        %571 = vmatprep.subr.mxu0 %v416
        %572 = vmatpush1.xpose.msra.mxu0 %v415
        %573 = vmatprep.subr.mxu0 %v412
        %574 = vmatpush1.xpose.msra.mxu0 %v411
        %575 = vmatprep.subr.mxu0 0.0
        %576 = vmatpush2.xpose.msra.mxu0 0.0
        %577 = vmatprep.subr.mxu0 0.0
        %578 = vmatpush2.xpose.msra.mxu0 0.0
        %579 = vmatprep.subr.mxu0 0.0
        %580 = vmatpush2.xpose.msra.mxu0 0.0
        %581 = vmatprep.subr.mxu0 0.0
        %582 = vmatpush2.xpose.msra.mxu0 0.0
        %583 = vmatprep.subr.mxu0 0.0
        %584 = vmatpush2.xpose.msra.mxu0 0.0
        %585 = vmatprep.subr.mxu0 0.0
        %586 = vmatpush2.xpose.msra.mxu0 0.0
        %587 = vmatprep.subr.mxu0 0.0
        %588 = vmatpush2.xpose.msra.mxu0 0.0
        %589 = vmatprep.subr.mxu0 0.0
        %590 = vmatpush2.xpose.msra.mxu0 0.0
        %591 = vmatprep.subr.mxu0 0.0
        %592 = vmatpush2.xpose.msra.mxu0 0.0
        %593 = vmatprep.subr.mxu0 0.0
        %594 = vmatpush2.xpose.msra.mxu0 0.0
        %595 = vmatprep.subr.mxu0 0.0
        %596 = vmatpush2.xpose.msra.mxu0 0.0
        %597 = vmatprep.subr.mxu0 0.0
        %598 = vmatpush2.xpose.msra.mxu0 0.0
        %599 = vmatprep.subr.mxu0 0.0
        %600 = vmatpush2.xpose.msra.mxu0 0.0
        %601 = vmatprep.subr.mxu0 0.0
        %602 = vmatpush2.xpose.msra.mxu0 0.0
        %603 = vmatprep.subr.mxu0 0.0
        %604 = vmatpush2.xpose.msra.mxu0 0.0
        %605 = vmatprep.subr.mxu0 0.0
        %606 = vmatpush2.xpose.msra.mxu0 0.0
        %607 = vmatprep.mubr.f32.mxu0 %v408
        %608 = vmatmul.mubr.f32.gmra.mxu0 %v407
        %v609 = vpop.f32.mrf.mxu0
        %v610 = vadd.f32 %v540, %v609
        %v611 = vpop.f32.mrf.mxu0
        %612 = vdwg.mxu0
        %v613 = vadd.f32 %v404, %v610
        %614 = vst [vmem:[#allocation2] sm:$0xff] %v613
        %p615 = scmp.eq.s32.totalorder %s21, 1
        // Predicated region
        $region60: #{sp_resized_linear.1} parent=50 // pred_check
          %p616 = pneg %p615
        $region61: #{sp_resized_linear.1} parent=50 // pred_check_branch
          %618 = sbr.rel (%p616) target = $region63
        $region62: #{sp_resized_linear.1} parent=50 // pred_region
          %v619 = vld [vmem:[#allocation2] sm:$0xff]
          %v620 = vld [vmem:[%s391] sm:$0x1]
          %v622 = vlaneseq
          %v623 = vshrl.u32 %v622, 7
          %v624 = vsub.s32 0, %v623
          %v625 = vrot.slane %v620, %v624
          %v627 = vadd.f32 %v619, %v625
          %628 = vst [vmem:[%s398] sm:$0xff] %v627
        $region63: #{sp_resized_linear.1} parent=50 // pred_fallthru
          _
        %p629 = scmp.lt.s32.totalorder %s19, 0
        %s630 = scalar_select %p629, %s19, 0
        %p631 = scmp.lt.s32.totalorder %s20, 0
        %s632 = scalar_select %p631, %s20, 0
        %s633 = sadd.s32 %s632, %s630
        %s634 = smul.addr %s633, 8
        %s635 = scalar_lea.vmem %s3, %s634
        // Predicated region
        $region64: #{sp_resized_linear.1} parent=50 // pred_check
          %p636 = pneg %p135
        $region65: #{sp_resized_linear.1} parent=50 // pred_check_branch
          %638 = sbr.rel (%p636) target = $region67
        $region66: #{sp_resized_linear.1} parent=50 // pred_region
          _
        $region67: #{sp_resized_linear.1} parent=50 // pred_fallthru
          _
        // Predicated region
        $region68: #{sp_resized_linear.1} parent=50 // pred_check
          %p639 = pneg %p135
        $region69: #{sp_resized_linear.1} parent=50 // pred_check_branch
          %641 = sbr.rel (%p639) target = $region71
        $region70: #{sp_resized_linear.1} parent=50 // pred_region
          %p642 = scmp.lt.s32.totalorder %s19, 0
          %s643 = scalar_select %p642, %s19, 0
          %p644 = scmp.lt.s32.totalorder %s20, 0
          %s645 = scalar_select %p644, %s20, 0
          %s646 = sadd.s32 %s645, %s643
          %s647 = smul.addr %s646, 8
          %s648 = scalar_lea.vmem %s3, %s647
        $region71: #{sp_resized_linear.1} parent=50 // pred_fallthru
          _
      $region51: #{sp_resized_linear.1} parent=5 // pred_fallthru
        _
      %p649 = scmp.le.s32.totalorder 2, %s9
      // Predicated region
      $region72: #{sp_resized_linear.1} parent=5 // pred_check
        %p650 = pneg %p649
      $region73: #{sp_resized_linear.1} parent=5 // pred_check_branch
        %652 = sbr.rel (%p650) target = $region75
      $region74: #{sp_resized_linear.1} parent=5 // pred_region
        %s653 = ssub.s32 %s9, 2
      $region75: #{sp_resized_linear.1} parent=5 // pred_fallthru
        _
    $region6: #{sp_resized_linear.1} parent=1 // loop_footer
      %s13 = sadd.s32 1, %s9
    $region7: #{sp_resized_linear.1} parent=1 // loop_footer_branch
      %8 = sbr.rel target = $region3
    $region8: #{sp_resized_linear.1} parent=1 // loop_exit
      _

</llo_original>
